<compile_context>
chip_gen: v5e
topology: v5e:2x2
jax: 0.10.0
libtpu: 0.0.40
codegen_flags: <defaults>
</compile_context>

<pallas_src>
import jax
import jax.numpy as jnp
from jax import lax
from jax.experimental import pallas as pl
from jax.experimental.pallas import tpu as pltpu

LN_EPS = 1e-5  # torch.nn.LayerNorm default


def _round_up(x, m):
    return ((x + m - 1) // m) * m


def resid_block_kernel(x_ref, w1_ref, b1_ref, w2_ref, b2_ref, o_ref, xn_ref, acc_ref):
    # x_ref : (tm, D) f32-ish   w1_ref: (D, tH) bf16   b1_ref: (1, tH) f32
    # w2_ref: (tH, D) bf16      b2_ref: (1, D)  f32
    # xn_ref: (tm, D) bf16 scratch (normalized x, MXU feed)
    # acc_ref:(tm, D) f32 scratch (second-matmul accumulator)
    h_idx = pl.program_id(1)
    n_h = pl.num_programs(1)

    @pl.when(h_idx == 0)
    def _():
        x = x_ref[...].astype(jnp.float32)
        # LayerNorm over last dim, elementwise_affine=False (no gamma/beta), eps=1e-5
        mean = jnp.mean(x, axis=-1, keepdims=True)
        cen = x - mean
        var = jnp.mean(cen * cen, axis=-1, keepdims=True)
        xn = cen * lax.rsqrt(var + LN_EPS)
        xn_ref[...] = xn.astype(xn_ref.dtype)           # bf16 for the MXU
        acc_ref[...] = jnp.zeros_like(acc_ref)

    # Linear(input_size -> hidden_size) on this H-tile, + bias, SiLU (f32)
    h = jnp.dot(xn_ref[...], w1_ref[...], preferred_element_type=jnp.float32)
    h = h + b1_ref[...]
    h = h * jax.nn.sigmoid(h)                           # SiLU
    # Dropout(p=0.0) is identity — nothing to do.
    # TODO(synk): dropout with p>0 (training mode) would need pltpu.prng_* masking.

    # Partial Linear(hidden_size -> input_size): accumulate this H-tile's contribution.
    acc_ref[...] += jnp.dot(h.astype(w2_ref.dtype), w2_ref[...],
                            preferred_element_type=jnp.float32)

    @pl.when(h_idx == n_h - 1)
    def _():
        x = x_ref[...].astype(jnp.float32)
        y = acc_ref[...] + b2_ref[...]
        o_ref[...] = (x + y).astype(o_ref.dtype)        # residual add in f32


def resid_block(x, w1, b1, w2, b2, *, tm_max=256, th_max=512):
    """x: [batch, seq, D]; w1: [D, H]; b1: [H]; w2: [H, D]; b2: [D]."""
    batch, seq, D = x.shape
    H = w1.shape[1]
    N = batch * seq

    # Row tile: large (MXU-friendly) but no bigger than the (padded) row count.
    tm = min(tm_max, _round_up(N, 16))
    N_pad = _round_up(N, tm)
    # Hidden tile: lane-dense multiple of 128, capped so weight tiles stay small.
    tH = min(th_max, _round_up(H, 128))
    H_pad = _round_up(H, tH)

    x2 = x.reshape(N, D)
    if N_pad != N:
        x2 = jnp.pad(x2, ((0, N_pad - N), (0, 0)))

    # bf16 weights for the MXU (halves weight DMA + VMEM); f32 biases.
    w1b = w1.astype(jnp.bfloat16)
    w2b = w2.astype(jnp.bfloat16)
    b1f = b1.astype(jnp.float32)
    if H_pad != H:
        # zero-padded hidden columns produce silu(0)=0 and zero W2 rows -> no effect
        w1b = jnp.pad(w1b, ((0, 0), (0, H_pad - H)))
        b1f = jnp.pad(b1f, ((0, H_pad - H),))
        w2b = jnp.pad(w2b, ((0, H_pad - H), (0, 0)))
    b1_2 = b1f.reshape(1, H_pad)
    b2_2 = b2.astype(jnp.float32).reshape(1, D)

    grid = (N_pad // tm, H_pad // tH)

    x_bytes = jnp.dtype(x.dtype).itemsize
    vmem_needed = (
        2 * tm * D * x_bytes      # x tile (double-buffered)
        + 2 * tm * D * x_bytes    # out tile (double-buffered)
        + 2 * D * tH * 2          # W1 tile, bf16 (double-buffered over H)
        + 2 * tH * D * 2          # W2 tile, bf16 (double-buffered over H)
        + 2 * tH * 4 + 2 * D * 4  # biases
        + tm * D * (2 + 4)        # scratch: xn (bf16) + acc (f32)
    )
    vmem_limit = min(64 * 1024 * 1024, max(32 * 1024 * 1024, vmem_needed + (4 << 20)))

    cost = pl.CostEstimate(
        flops=4 * N * D * H,                     # two matmuls, 2*N*D*H each
        transcendentals=N * H,                   # sigmoid
        bytes_accessed=2 * N * D * x_bytes + 2 * (D * H + H * D) + 4 * (H + D),
    )

    out = pl.pallas_call(
        resid_block_kernel,
        out_shape=jax.ShapeDtypeStruct((N_pad, D), x.dtype),
        grid_spec=pltpu.PrefetchScalarGridSpec(
            num_scalar_prefetch=0,
            grid=grid,
            in_specs=[
                pl.BlockSpec((tm, D), lambda i, h: (i, 0)),    # x rows (constant over H)
                pl.BlockSpec((D, tH), lambda i, h: (0, h)),    # W1 hidden-tile
                pl.BlockSpec((1, tH), lambda i, h: (0, h)),    # b1 hidden-tile
                pl.BlockSpec((tH, D), lambda i, h: (h, 0)),    # W2 hidden-tile
                pl.BlockSpec((1, D), lambda i, h: (0, 0)),     # b2
            ],
            out_specs=pl.BlockSpec((tm, D), lambda i, h: (i, 0)),
            scratch_shapes=[
                pltpu.VMEM((tm, D), jnp.bfloat16),   # normalized x (MXU feed)
                pltpu.VMEM((tm, D), jnp.float32),    # accumulator
            ],
        ),
        compiler_params=pltpu.CompilerParams(
            dimension_semantics=("parallel", "arbitrary"),
            vmem_limit_bytes=vmem_limit,
        ),
        cost_estimate=cost,
    )(x2, w1b, b1_2, w2b, b2_2)

    return out[:N].reshape(batch, seq, D)


def resid_block_ref(x, w1, b1, w2, b2):
    # Mirrors the kernel's precision strategy (bf16 MXU inputs, f32 accumulation).
    xf = x.astype(jnp.float32)
    mean = jnp.mean(xf, axis=-1, keepdims=True)
    var = jnp.mean((xf - mean) ** 2, axis=-1, keepdims=True)
    xn = (xf - mean) * lax.rsqrt(var + LN_EPS)
    h = jnp.dot(xn.astype(jnp.bfloat16), w1.astype(jnp.bfloat16),
                preferred_element_type=jnp.float32) + b1.astype(jnp.float32)
    h = h * jax.nn.sigmoid(h)
    y = jnp.dot(h.astype(jnp.bfloat16), w2.astype(jnp.bfloat16),
                preferred_element_type=jnp.float32) + b2.astype(jnp.float32)
    return (xf + y).astype(x.dtype)


if __name__ == "__main__":
    key = jax.random.PRNGKey(0)
    batch, seq = 2, 8
    input_size, hidden_size = 128, 256   # lane-dense (multiples of 128)

    k_x, k_w1, k_b1, k_w2, k_b2 = jax.random.split(key, 5)
    x = jax.random.normal(k_x, (batch, seq, input_size), dtype=jnp.float32)

    # Deterministic synthetic parameters (uniform ~ PyTorch Linear init scale).
    lim1 = 1.0 / (input_size ** 0.5)
    lim2 = 1.0 / (hidden_size ** 0.5)
    w1 = jax.random.uniform(k_w1, (input_size, hidden_size), jnp.float32, -lim1, lim1)
    b1 = jax.random.uniform(k_b1, (hidden_size,), jnp.float32, -lim1, lim1)
    w2 = jax.random.uniform(k_w2, (hidden_size, input_size), jnp.float32, -lim2, lim2)
    b2 = jax.random.uniform(k_b2, (input_size,), jnp.float32, -lim2, lim2)

    out = resid_block(x, w1, b1, w2, b2)
    out = jax.block_until_ready(out)

    ref = resid_block_ref(x, w1, b1, w2, b2)
    assert out.shape == x.shape and out.dtype == x.dtype
    assert jnp.allclose(out, ref, atol=2e-3, rtol=2e-3), "mismatch vs reference"
    print("KERNEL_OK")
</pallas_src>

<mosaic_0001>
module attributes {stable_mosaic.version = 11 : i64} {
  func.func @resid_block_kernel(%arg0: i32, %arg1: i32, %arg2: memref<16x128xf32, #tpu.memory_space<vmem>>, %arg3: memref<128x256xbf16, #tpu.memory_space<vmem>>, %arg4: memref<1x256xf32, #tpu.memory_space<vmem>>, %arg5: memref<256x128xbf16, #tpu.memory_space<vmem>>, %arg6: memref<1x128xf32, #tpu.memory_space<vmem>>, %arg7: memref<16x128xf32, #tpu.memory_space<vmem>>, %arg8: memref<16x128xbf16, #tpu.memory_space<vmem>>, %arg9: memref<16x128xf32, #tpu.memory_space<vmem>>) attributes {dimension_semantics = [#tpu.dimension_semantics<parallel>, #tpu.dimension_semantics<arbitrary>], iteration_bounds = array<i64: 1, 1>, scalar_prefetch = 0 : i64, scratch_operands = 2 : i64, tpu.core_type = #tpu.core_type<tc>, window_params = [{transform_indices = @transform_0, window_bounds = array<i64: 16, 128>}, {transform_indices = @transform_1, window_bounds = array<i64: 128, 256>}, {transform_indices = @transform_2, window_bounds = array<i64: 1, 256>}, {transform_indices = @transform_3, window_bounds = array<i64: 256, 128>}, {pipeline_mode = #tpu.pipeline_mode<synchronous>, transform_indices = @transform_4, window_bounds = array<i64: 1, 128>}, {transform_indices = @transform_5, window_bounds = array<i64: 16, 128>}]} {
    %c0_i32 = arith.constant 0 : i32
    %0 = arith.cmpi eq, %arg1, %c0_i32 : i32
    %1 = arith.extui %0 : i1 to i32
    %c0_i32_0 = arith.constant 0 : i32
    %2 = arith.cmpi ne, %1, %c0_i32_0 : i32
    scf.if %2 {
      %c0_16 = arith.constant 0 : index
      %c0_17 = arith.constant 0 : index
      %24 = vector.load %arg2[%c0_16, %c0_17] : memref<16x128xf32, #tpu.memory_space<vmem>>, vector<16x128xf32>
      %cst_18 = arith.constant dense<0.000000e+00> : vector<16xf32>
      %25 = vector.multi_reduction <add>, %24, %cst_18 [1] : vector<16x128xf32> to vector<16xf32>
      %26 = vector.shape_cast %25 : vector<16xf32> to vector<16x1xf32>
      %cst_19 = arith.constant 1.280000e+02 : f32
      %27 = vector.broadcast %cst_19 : f32 to vector<16x1xf32>
      %28 = arith.divf %26, %27 : vector<16x1xf32>
      %29 = vector.broadcast %28 : vector<16x1xf32> to vector<16x128xf32>
      %30 = arith.subf %24, %29 : vector<16x128xf32>
      %31 = arith.mulf %30, %30 : vector<16x128xf32>
      %cst_20 = arith.constant dense<0.000000e+00> : vector<16xf32>
      %32 = vector.multi_reduction <add>, %31, %cst_20 [1] : vector<16x128xf32> to vector<16xf32>
      %33 = vector.shape_cast %32 : vector<16xf32> to vector<16x1xf32>
      %cst_21 = arith.constant 1.280000e+02 : f32
      %34 = vector.broadcast %cst_21 : f32 to vector<16x1xf32>
      %35 = arith.divf %33, %34 : vector<16x1xf32>
      %cst_22 = arith.constant 9.99999974E-6 : f32
      %36 = vector.broadcast %cst_22 : f32 to vector<16x1xf32>
      %37 = arith.addf %35, %36 : vector<16x1xf32>
      %38 = math.rsqrt %37 : vector<16x1xf32>
      %39 = vector.broadcast %38 : vector<16x1xf32> to vector<16x128xf32>
      %40 = arith.mulf %30, %39 : vector<16x128xf32>
      %41 = arith.truncf %40 : vector<16x128xf32> to vector<16x128xbf16>
      %c0_23 = arith.constant 0 : index
      %c0_24 = arith.constant 0 : index
      %42 = vector.load %arg8[%c0_23, %c0_24] : memref<16x128xbf16, #tpu.memory_space<vmem>>, vector<16x128xbf16>
      tpu.vector_store %arg8[%c0_23, %c0_24], %41 {strides = array<i32>} : memref<16x128xbf16, #tpu.memory_space<vmem>>, vector<16x128xbf16>,
      %cst_25 = arith.constant 0.000000e+00 : f32
      %43 = vector.broadcast %cst_25 : f32 to vector<16x128xf32>
      %c0_26 = arith.constant 0 : index
      %c0_27 = arith.constant 0 : index
      %44 = vector.load %arg9[%c0_26, %c0_27] : memref<16x128xf32, #tpu.memory_space<vmem>>, vector<16x128xf32>
      tpu.vector_store %arg9[%c0_26, %c0_27], %43 {strides = array<i32>} : memref<16x128xf32, #tpu.memory_space<vmem>>, vector<16x128xf32>,
    } else {
    }
    %c0 = arith.constant 0 : index
    %c0_1 = arith.constant 0 : index
    %3 = vector.load %arg8[%c0, %c0_1] : memref<16x128xbf16, #tpu.memory_space<vmem>>, vector<16x128xbf16>
    %c0_2 = arith.constant 0 : index
    %c0_3 = arith.constant 0 : index
    %4 = vector.load %arg3[%c0_2, %c0_3] : memref<128x256xbf16, #tpu.memory_space<vmem>>, vector<128x256xbf16>
    %cst = arith.constant dense<0.000000e+00> : vector<16x256xf32>
    %5 = tpu.matmul %3, %4, %cst {dimension_numbers = #tpu.dot_dimension_numbers<[1], [0], [0], [1], [0, 0, 1, 1], [], []>} : vector<16x128xbf16>, vector<128x256xbf16>, vector<16x256xf32> -> vector<16x256xf32>
    %c0_4 = arith.constant 0 : index
    %c0_5 = arith.constant 0 : index
    %6 = vector.load %arg4[%c0_4, %c0_5] : memref<1x256xf32, #tpu.memory_space<vmem>>, vector<1x256xf32>
    %7 = vector.broadcast %6 : vector<1x256xf32> to vector<16x256xf32>
    %8 = arith.addf %5, %7 : vector<16x256xf32>
    %9 = arith.negf %8 : vector<16x256xf32>
    %10 = math.exp %9 : vector<16x256xf32>
    %cst_6 = arith.constant 1.000000e+00 : f32
    %11 = vector.broadcast %cst_6 : f32 to vector<16x256xf32>
    %12 = arith.addf %11, %10 : vector<16x256xf32>
    %13 = arith.divf %11, %12 : vector<16x256xf32>
    %14 = arith.mulf %8, %13 : vector<16x256xf32>
    %c0_7 = arith.constant 0 : index
    %c0_8 = arith.constant 0 : index
    %15 = vector.load %arg9[%c0_7, %c0_8] : memref<16x128xf32, #tpu.memory_space<vmem>>, vector<16x128xf32>
    %16 = arith.truncf %14 : vector<16x256xf32> to vector<16x256xbf16>
    %c0_9 = arith.constant 0 : index
    %c0_10 = arith.constant 0 : index
    %17 = vector.load %arg5[%c0_9, %c0_10] : memref<256x128xbf16, #tpu.memory_space<vmem>>, vector<256x128xbf16>
    %cst_11 = arith.constant dense<0.000000e+00> : vector<16x128xf32>
    %18 = tpu.matmul %16, %17, %cst_11 {dimension_numbers = #tpu.dot_dimension_numbers<[1], [0], [0], [1], [0, 0, 1, 1], [], []>} : vector<16x256xbf16>, vector<256x128xbf16>, vector<16x128xf32> -> vector<16x128xf32>
    %19 = arith.addf %15, %18 : vector<16x128xf32>
    %c0_12 = arith.constant 0 : index
    %c0_13 = arith.constant 0 : index
    %20 = vector.load %arg9[%c0_12, %c0_13] : memref<16x128xf32, #tpu.memory_space<vmem>>, vector<16x128xf32>
    tpu.vector_store %arg9[%c0_12, %c0_13], %19 {strides = array<i32>} : memref<16x128xf32, #tpu.memory_space<vmem>>, vector<16x128xf32>,
    %c0_i32_14 = arith.constant 0 : i32
    %21 = arith.cmpi eq, %arg1, %c0_i32_14 : i32
    %22 = arith.extui %21 : i1 to i32
    %c0_i32_15 = arith.constant 0 : i32
    %23 = arith.cmpi ne, %22, %c0_i32_15 : i32
    scf.if %23 {
      %c0_16 = arith.constant 0 : index
      %c0_17 = arith.constant 0 : index
      %24 = vector.load %arg2[%c0_16, %c0_17] : memref<16x128xf32, #tpu.memory_space<vmem>>, vector<16x128xf32>
      %c0_18 = arith.constant 0 : index
      %c0_19 = arith.constant 0 : index
      %25 = vector.load %arg9[%c0_18, %c0_19] : memref<16x128xf32, #tpu.memory_space<vmem>>, vector<16x128xf32>
      %c0_20 = arith.constant 0 : index
      %c0_21 = arith.constant 0 : index
      %26 = vector.load %arg6[%c0_20, %c0_21] : memref<1x128xf32, #tpu.memory_space<vmem>>, vector<1x128xf32>
      %27 = vector.broadcast %26 : vector<1x128xf32> to vector<16x128xf32>
      %28 = arith.addf %25, %27 : vector<16x128xf32>
      %29 = arith.addf %24, %28 : vector<16x128xf32>
      %c0_22 = arith.constant 0 : index
      %c0_23 = arith.constant 0 : index
      %30 = vector.load %arg7[%c0_22, %c0_23] : memref<16x128xf32, #tpu.memory_space<vmem>>, vector<16x128xf32>
      tpu.vector_store %arg7[%c0_22, %c0_23], %29 {strides = array<i32>} : memref<16x128xf32, #tpu.memory_space<vmem>>, vector<16x128xf32>,
    } else {
    }
    return
  }
  func.func @transform_0(%arg0: i32, %arg1: i32) -> (i32, i32) {
    %c0_i32 = arith.constant 0 : i32
    %c0_i32_0 = arith.constant 0 : i32
    return %arg0, %c0_i32 : i32, i32
  }
  func.func @transform_1(%arg0: i32, %arg1: i32) -> (i32, i32) {
    %c0_i32 = arith.constant 0 : i32
    %c0_i32_0 = arith.constant 0 : i32
    return %c0_i32, %arg1 : i32, i32
  }
  func.func @transform_2(%arg0: i32, %arg1: i32) -> (i32, i32) {
    %c0_i32 = arith.constant 0 : i32
    %c0_i32_0 = arith.constant 0 : i32
    return %c0_i32, %arg1 : i32, i32
  }
  func.func @transform_3(%arg0: i32, %arg1: i32) -> (i32, i32) {
    %c0_i32 = arith.constant 0 : i32
    %c0_i32_0 = arith.constant 0 : i32
    return %arg1, %c0_i32 : i32, i32
  }
  func.func @transform_4(%arg0: i32, %arg1: i32) -> (i32, i32) {
    %c0_i32 = arith.constant 0 : i32
    %c0_i32_0 = arith.constant 0 : i32
    %c0_i32_1 = arith.constant 0 : i32
    return %c0_i32, %c0_i32_0 : i32, i32
  }
  func.func @transform_5(%arg0: i32, %arg1: i32) -> (i32, i32) {
    %c0_i32 = arith.constant 0 : i32
    %c0_i32_0 = arith.constant 0 : i32
    return %arg0, %c0_i32 : i32, i32
  }
}

</mosaic_0001>

<llo_original>
// kernel: tpu_custom_call.1
$region0: #{tpu_custom_call.1}
  #allocation0 [shape = 'u32[]', space=smem, size = 0x4, offset = 0x4, fixed_abs, tag = 'smem constant byte address 0x4 - core index']
  #allocation1 [shape = 'u32[72,128]{1,0:T(1,128)}', space=vmem, size = 0x9000, scoped, tag = 'internal scratch']
  #allocation2 [shape = 'bf16[16,128]{1,0:T(8,128)(2,1)}', space=vmem, size = 0x1000, scoped, tag = 'scratch operand']
  #allocation3 [shape = 'f32[16,128]{1,0:T(8,128)}', space=vmem, size = 0x2000, scoped, tag = 'scratch operand']
  %s0 = inlined_call_operand.hbm [shape: f32[16,128], index: 0, kind: input, shape index: {}]
  %s1 = inlined_call_operand.hbm [shape: bf16[128,256], index: 1, kind: input, shape index: {}]
  %s2 = inlined_call_operand.hbm [shape: f32[1,256], index: 2, kind: input, shape index: {}]
  %s3 = inlined_call_operand.hbm [shape: bf16[256,128], index: 3, kind: input, shape index: {}]
  %s4 = inlined_call_operand.vmem [shape: f32[1,128], index: 4, kind: input, shape index: {}]
  %s5 = inlined_call_operand.hbm [shape: f32[16,128], index: 5, kind: output, shape index: {}]
  %s6 = sld [smem:[#allocation0]]
  $region54: #{tpu_custom_call.1} parent=0
    _
  %s8 = ssub.s32 1, %s6
  %s9 = scalar_select 0, %s8, %s6
  $region1: #{tpu_custom_call.1} parent=0
    #allocation4 [shape = 'u8[8192]{0}', space=vmem, size = 0x2000, scoped, tag = 'input window, operand 0, single buffered']
    #allocation5 [shape = 's32[1]{0}', space=sflag, size = 0x4, scoped, tag = 'scoped memory for tpu_custom_call.1']
    #allocation6 [shape = 's32[1]{0}', space=sflag, size = 0x4, scoped, tag = 'scoped memory for tpu_custom_call.1']
    #allocation7 [shape = 'u8[65536]{0}', space=vmem, size = 0x10000, scoped, tag = 'input window, operand 1, single buffered']
    #allocation8 [shape = 's32[1]{0}', space=sflag, size = 0x4, scoped, tag = 'scoped memory for tpu_custom_call.1']
    #allocation9 [shape = 'u8[1024]{0}', space=vmem, size = 0x400, scoped, tag = 'input window, operand 2, single buffered']
    #allocation10 [shape = 'u8[65536]{0}', space=vmem, size = 0x10000, scoped, tag = 'input window, operand 3, single buffered']
    #allocation11 [shape = 's32[1]{0}', space=sflag, size = 0x4, scoped, tag = 'scoped memory for tpu_custom_call.1']
    #allocation12 [shape = 'u8[8192]{0}', space=vmem, size = 0x2000, scoped, tag = 'output window, operand 0, single buffered']
    %10 = vsyncpa [#allocation5], 0
    %11 = vsyncpa [#allocation8], 0
    %12 = vsyncpa [#allocation11], 0
    %13 = vsyncpa [#allocation6], 0
    // Predicated region
    $region2: #{tpu_custom_call.1} parent=1 // pred_check
      _
    $region3: #{tpu_custom_call.1} parent=1 // pred_check_branch
      %15 = sbr.rel (0) target = $region5
    $region4: #{tpu_custom_call.1} parent=1 // pred_region
      %17 = vsyncadd [#allocation5], 0
      %s18 = sshll.u32 %s0, 4
      %s19 = int_to_ptr.hbm [resolvable:$true] %s18
      %s20 = sshll.u32 [#allocation4], 4
      %s21 = int_to_ptr.vmem [resolvable:$true] %s20
      %26 = dma.hbm_to_vmem [thread:$0]  %s19, 256, %s21, [#allocation5], 128, 128, 8
    $region5: #{tpu_custom_call.1} parent=1 // pred_fallthru
      _
    // Predicated region
    $region6: #{tpu_custom_call.1} parent=1 // pred_check
      _
    $region7: #{tpu_custom_call.1} parent=1 // pred_check_branch
      %28 = sbr.rel (0) target = $region9
    $region8: #{tpu_custom_call.1} parent=1 // pred_region
      %30 = vsyncadd [#allocation8], 0
      %s31 = sshll.u32 %s1, 4
      %s32 = int_to_ptr.hbm [resolvable:$true] %s31
      %s33 = sshll.u32 [#allocation7], 4
      %s34 = int_to_ptr.vmem [resolvable:$true] %s33
      %39 = dma.hbm_to_vmem [thread:$0]  %s32, 2048, %s34, [#allocation8], 128, 128, 8
    $region9: #{tpu_custom_call.1} parent=1 // pred_fallthru
      _
    // Predicated region
    $region10: #{tpu_custom_call.1} parent=1 // pred_check
      _
    $region11: #{tpu_custom_call.1} parent=1 // pred_check_branch
      %41 = sbr.rel (0) target = $region13
    $region12: #{tpu_custom_call.1} parent=1 // pred_region
      %43 = vsyncadd [#allocation8], 0
      %s45 = sshll.u32 %s2, 4
      %s46 = int_to_ptr.hbm [resolvable:$true] %s45
      %s47 = sshll.u32 [#allocation9], 4
      %s48 = int_to_ptr.vmem [resolvable:$true] %s47
      %50 = dma.hbm_to_vmem [thread:$0]  %s46, 32, %s48, [#allocation8]
    $region13: #{tpu_custom_call.1} parent=1 // pred_fallthru
      _
    // Predicated region
    $region14: #{tpu_custom_call.1} parent=1 // pred_check
      _
    $region15: #{tpu_custom_call.1} parent=1 // pred_check_branch
      %52 = sbr.rel (0) target = $region17
    $region16: #{tpu_custom_call.1} parent=1 // pred_region
      %54 = vsyncadd [#allocation11], 0
      %s55 = sshll.u32 %s3, 4
      %s56 = int_to_ptr.hbm [resolvable:$true] %s55
      %s57 = sshll.u32 [#allocation10], 4
      %s58 = int_to_ptr.vmem [resolvable:$true] %s57
      %63 = dma.hbm_to_vmem [thread:$0]  %s56, 2048, %s58, [#allocation11], 64, 64, 4
    $region17: #{tpu_custom_call.1} parent=1 // pred_fallthru
      _
    // Predicated region
    $region18: #{tpu_custom_call.1} parent=1 // pred_check
      _
    $region19: #{tpu_custom_call.1} parent=1 // pred_check_branch
      %65 = sbr.rel (0) target = $region21
    $region20: #{tpu_custom_call.1} parent=1 // pred_region
      _
    $region21: #{tpu_custom_call.1} parent=1 // pred_fallthru
      _
    // Predicated region
    $region22: #{tpu_custom_call.1} parent=1 // pred_check
      _
    $region23: #{tpu_custom_call.1} parent=1 // pred_check_branch
      %67 = sbr.rel (0) target = $region25
    $region24: #{tpu_custom_call.1} parent=1 // pred_region
      %69 = dma.done [#allocation5], 256
    $region25: #{tpu_custom_call.1} parent=1 // pred_fallthru
      _
    // Predicated region
    $region26: #{tpu_custom_call.1} parent=1 // pred_check
      _
    $region27: #{tpu_custom_call.1} parent=1 // pred_check_branch
      %71 = sbr.rel (0) target = $region29
    $region28: #{tpu_custom_call.1} parent=1 // pred_region
      %73 = dma.done [#allocation8], 2048
    $region29: #{tpu_custom_call.1} parent=1 // pred_fallthru
      _
    // Predicated region
    $region30: #{tpu_custom_call.1} parent=1 // pred_check
      _
    $region31: #{tpu_custom_call.1} parent=1 // pred_check_branch
      %75 = sbr.rel (0) target = $region33
    $region32: #{tpu_custom_call.1} parent=1 // pred_region
      %77 = dma.done [#allocation8], 32
    $region33: #{tpu_custom_call.1} parent=1 // pred_fallthru
      _
    // Predicated region
    $region34: #{tpu_custom_call.1} parent=1 // pred_check
      _
    $region35: #{tpu_custom_call.1} parent=1 // pred_check_branch
      %79 = sbr.rel (0) target = $region37
    $region36: #{tpu_custom_call.1} parent=1 // pred_region
      %81 = dma.done [#allocation11], 2048
    $region37: #{tpu_custom_call.1} parent=1 // pred_fallthru
      _
    %p82 = scmp.eq.s32.totalorder 0, 0
    // Predicated region
    $region38: #{tpu_custom_call.1} parent=1 // pred_check
      %p83 = pneg %p82
    $region39: #{tpu_custom_call.1} parent=1 // pred_check_branch
      %85 = sbr.rel (%p83) target = $region41
    $region40: #{tpu_custom_call.1} parent=1 // pred_region
      %v86 = vld [vmem:[#allocation4] sm:$0xff]
      %v87 = vld [vmem:[#allocation4 + $0x8] sm:$0xff]
      %88 = vadd.xlane.f32.xlu0 %v86
      %v89 = vpop.xlane.xlu0 %88
      %90 = vadd.xlane.f32.xlu0 %v87
      %v91 = vpop.xlane.xlu0 %90
      %v92 = vrcp.pop 128.0
      %v93 = vmul.f32 128.0, %v92
      %v94 = vsub.f32 1.0, %v93
      %v95 = vmul.f32 %v92, %v94
      %v96 = vadd.f32 %v92, %v95
      %vm97 = vweird.f32 %v92
      %v98 = vsel %vm97, %v92, %v96
      %v99 = vmul.f32 %v89, %v98
      %v100 = vmul.f32 %v91, %v98
      %v101 = vsub.f32 %v86, %v99
      %v102 = vsub.f32 %v87, %v100
      %v103 = vmul.f32 %v101, %v101
      %v104 = vmul.f32 %v102, %v102
      %105 = vadd.xlane.f32.xlu0 %v103
      %v106 = vpop.xlane.xlu0 %105
      %107 = vadd.xlane.f32.xlu0 %v104
      %v108 = vpop.xlane.xlu0 %107
      %v109 = vmul.f32 %v106, %v98
      %v110 = vmul.f32 %v108, %v98
      %v111 = vadd.f32 %v109, 1e-05
      %v112 = vadd.f32 %v110, 1e-05
      %v113 = vrsqrt.pop %v111
      %v114 = vmul.f32 %v113, %v111
      %v115 = vmul.f32 %v114, %v113
      %v116 = vmul.f32 0.5, %v115
      %v117 = vsub.f32 1.5, %v116
      %v118 = vmul.f32 %v113, %v117
      %vm119 = vweird.f32 %v111
      %vm120 = vweird.f32 %v113
      %vm121 = vmor %vm119, %vm120
      %v122 = vsel %vm121, %v113, %v118
      %v123 = vrsqrt.pop %v112
      %v124 = vmul.f32 %v123, %v112
      %v125 = vmul.f32 %v124, %v123
      %v126 = vmul.f32 0.5, %v125
      %v127 = vsub.f32 1.5, %v126
      %v128 = vmul.f32 %v123, %v127
      %vm129 = vweird.f32 %v112
      %vm130 = vweird.f32 %v123
      %vm131 = vmor %vm129, %vm130
      %v132 = vsel %vm131, %v123, %v128
      %v133 = vmul.f32 %v101, %v122
      %v134 = vmul.f32 %v102, %v132
      %v135 = vpack.c.bf16 %v133, %v133
      %v136 = vpack.c.bf16 %v134, %v134
      %137 = vst [vmem:[#allocation2] sm:$0xf] %v135
      %138 = vst [vmem:[#allocation2 + $0x4] sm:$0xf] %v136
      %139 = vst [vmem:[#allocation3] sm:$0xff] 0.0
      %140 = vst [vmem:[#allocation3 + $0x8] sm:$0xff] 0.0
    $region41: #{tpu_custom_call.1} parent=1 // pred_fallthru
      _
    %v141 = vld [vmem:[#allocation2] sm:$0xf]
    %v142 = vld [vmem:[#allocation2 + $0x4] sm:$0xf]
    %v143 = vld [vmem:[#allocation7] sm:$0xff]
    %v144 = vld [vmem:[#allocation7 + $0x8] sm:$0xff]
    %v145 = vld [vmem:[#allocation7 + $0x10] sm:$0xff]
    %v146 = vld [vmem:[#allocation7 + $0x18] sm:$0xff]
    %v147 = vld [vmem:[#allocation7 + $0x20] sm:$0xff]
    %v148 = vld [vmem:[#allocation7 + $0x28] sm:$0xff]
    %v149 = vld [vmem:[#allocation7 + $0x30] sm:$0xff]
    %v150 = vld [vmem:[#allocation7 + $0x38] sm:$0xff]
    %v151 = vld [vmem:[#allocation7 + $0x40] sm:$0xff]
    %v152 = vld [vmem:[#allocation7 + $0x48] sm:$0xff]
    %v153 = vld [vmem:[#allocation7 + $0x50] sm:$0xff]
    %v154 = vld [vmem:[#allocation7 + $0x58] sm:$0xff]
    %v155 = vld [vmem:[#allocation7 + $0x60] sm:$0xff]
    %v156 = vld [vmem:[#allocation7 + $0x68] sm:$0xff]
    %v157 = vld [vmem:[#allocation7 + $0x70] sm:$0xff]
    %v158 = vld [vmem:[#allocation7 + $0x78] sm:$0xff]
    %v159 = vld [vmem:[#allocation9] sm:$0x3]
    %v161 = vperm.slane %v159, 0
    %v162 = vperm.slane %v159, 1
    %v167 = vunpack.c.l.b16 %v141
    %v168 = vunpack.c.l.b16 %v142
    %v169 = vpack.c.b16 %v168, %v167
    %v187 = vunpack.c.l.b16 %v143
    %v188 = vunpack.c.h.b16 %v143
    %v189 = vunpack.c.l.b16 %v144
    %v190 = vunpack.c.h.b16 %v144
    %v191 = vunpack.c.l.b16 %v145
    %v192 = vunpack.c.h.b16 %v145
    %v193 = vunpack.c.l.b16 %v146
    %v194 = vunpack.c.h.b16 %v146
    %v195 = vunpack.c.l.b16 %v147
    %v196 = vunpack.c.h.b16 %v147
    %v197 = vunpack.c.l.b16 %v148
    %v198 = vunpack.c.h.b16 %v148
    %v199 = vunpack.c.l.b16 %v149
    %v200 = vunpack.c.h.b16 %v149
    %v201 = vunpack.c.l.b16 %v150
    %v202 = vunpack.c.h.b16 %v150
    %v203 = vunpack.c.l.b16 %v151
    %v204 = vunpack.c.h.b16 %v151
    %v205 = vunpack.c.l.b16 %v152
    %v206 = vunpack.c.h.b16 %v152
    %v207 = vunpack.c.l.b16 %v153
    %v208 = vunpack.c.h.b16 %v153
    %v209 = vunpack.c.l.b16 %v154
    %v210 = vunpack.c.h.b16 %v154
    %v211 = vunpack.c.l.b16 %v155
    %v212 = vunpack.c.h.b16 %v155
    %v213 = vunpack.c.l.b16 %v156
    %v214 = vunpack.c.h.b16 %v156
    %v215 = vunpack.c.l.b16 %v157
    %v216 = vunpack.c.h.b16 %v157
    %v217 = vunpack.c.l.b16 %v158
    %v218 = vunpack.c.h.b16 %v158
    %v219 = vpack.c.b16 %v189, %v187
    %v220 = vpack.c.b16 %v190, %v188
    %v221 = vpack.c.b16 %v193, %v191
    %v222 = vpack.c.b16 %v194, %v192
    %v223 = vpack.c.b16 %v197, %v195
    %v224 = vpack.c.b16 %v198, %v196
    %v225 = vpack.c.b16 %v201, %v199
    %v226 = vpack.c.b16 %v202, %v200
    %v227 = vpack.c.b16 %v205, %v203
    %v228 = vpack.c.b16 %v206, %v204
    %v229 = vpack.c.b16 %v209, %v207
    %v230 = vpack.c.b16 %v210, %v208
    %v231 = vpack.c.b16 %v213, %v211
    %v232 = vpack.c.b16 %v214, %v212
    %v233 = vpack.c.b16 %v217, %v215
    %v234 = vpack.c.b16 %v218, %v216
    %251 = vmatpush.bf16.msra.mxu0 %v233
    %252 = vmatpush.bf16.msra.mxu0 %v231
    %253 = vmatpush.bf16.msra.mxu0 %v229
    %254 = vmatpush.bf16.msra.mxu0 %v227
    %255 = vmatpush.bf16.msra.mxu0 %v225
    %256 = vmatpush.bf16.msra.mxu0 %v223
    %257 = vmatpush.bf16.msra.mxu0 %v221
    %258 = vmatpush.bf16.msra.mxu0 %v219
    %259 = vmatmul.bf16.gmra.mxu0 %v169
    %v260 = vpop.f32.mrf.mxu0
    %v261 = vadd.f32 %v161, %v260
    %v262 = vpop.f32.mrf.mxu0
    %v263 = vadd.f32 %v161, %v262
    %264 = vdwg.mxu0
    %265 = vmatpush.bf16.msra.mxu0 %v234
    %266 = vmatpush.bf16.msra.mxu0 %v232
    %267 = vmatpush.bf16.msra.mxu0 %v230
    %268 = vmatpush.bf16.msra.mxu0 %v228
    %269 = vmatpush.bf16.msra.mxu0 %v226
    %270 = vmatpush.bf16.msra.mxu0 %v224
    %271 = vmatpush.bf16.msra.mxu0 %v222
    %272 = vmatpush.bf16.msra.mxu0 %v220
    %273 = vmatmul.bf16.gmra.mxu0 %v169
    %v274 = vpop.f32.mrf.mxu0
    %v275 = vadd.f32 %v162, %v274
    %v276 = vpop.f32.mrf.mxu0
    %v277 = vadd.f32 %v162, %v276
    %278 = vdwg.mxu0
    %v279 = vxor.u32 %v261, 2147483648
    %v280 = vxor.u32 %v275, 2147483648
    %v281 = vxor.u32 %v263, 2147483648
    %v282 = vxor.u32 %v277, 2147483648
    %v283 = vmul.f32 %v279, 1.442695
    %v284 = vpow.pop %v283
    %v285 = vmul.f32 %v280, 1.442695
    %v286 = vpow.pop %v285
    %v287 = vmul.f32 %v281, 1.442695
    %v288 = vpow.pop %v287
    %v289 = vmul.f32 %v282, 1.442695
    %v290 = vpow.pop %v289
    %v291 = vadd.f32 %v284, 1.0
    %v292 = vadd.f32 %v286, 1.0
    %v293 = vadd.f32 %v288, 1.0
    %v294 = vadd.f32 %v290, 1.0
    %v295 = vrcp.pop %v291
    %v296 = vmul.f32 %v291, %v295
    %v297 = vsub.f32 1.0, %v296
    %v298 = vmul.f32 %v295, %v297
    %v299 = vadd.f32 %v295, %v298
    %vm300 = vweird.f32 %v291
    %vm301 = vweird.f32 %v295
    %vm302 = vmor %vm300, %vm301
    %v303 = vsel %vm302, %v295, %v299
    %v304 = vand.u32 2147483647, %v291
    %vm305 = vcmp.eq.f32.partialorder %v304, 8.507059e+37
    %v306 = vand.u32 %v291, 2147483648
    %v307 = vor.u32 1.1754944e-38, %v306
    %v308 = vsel %vm305, %v307, %v303
    %v309 = vmul.f32 1.0, %v308
    %v310 = vrcp.pop %v292
    %v311 = vmul.f32 %v292, %v310
    %v312 = vsub.f32 1.0, %v311
    %v313 = vmul.f32 %v310, %v312
    %v314 = vadd.f32 %v310, %v313
    %vm315 = vweird.f32 %v292
    %vm316 = vweird.f32 %v310
    %vm317 = vmor %vm315, %vm316
    %v318 = vsel %vm317, %v310, %v314
    %v319 = vand.u32 2147483647, %v292
    %vm320 = vcmp.eq.f32.partialorder %v319, 8.507059e+37
    %v321 = vand.u32 %v292, 2147483648
    %v322 = vor.u32 1.1754944e-38, %v321
    %v323 = vsel %vm320, %v322, %v318
    %v324 = vmul.f32 1.0, %v323
    %v325 = vrcp.pop %v293
    %v326 = vmul.f32 %v293, %v325
    %v327 = vsub.f32 1.0, %v326
    %v328 = vmul.f32 %v325, %v327
    %v329 = vadd.f32 %v325, %v328
    %vm330 = vweird.f32 %v293
    %vm331 = vweird.f32 %v325
    %vm332 = vmor %vm330, %vm331
    %v333 = vsel %vm332, %v325, %v329
    %v334 = vand.u32 2147483647, %v293
    %vm335 = vcmp.eq.f32.partialorder %v334, 8.507059e+37
    %v336 = vand.u32 %v293, 2147483648
    %v337 = vor.u32 1.1754944e-38, %v336
    %v338 = vsel %vm335, %v337, %v333
    %v339 = vmul.f32 1.0, %v338
    %v340 = vrcp.pop %v294
    %v341 = vmul.f32 %v294, %v340
    %v342 = vsub.f32 1.0, %v341
    %v343 = vmul.f32 %v340, %v342
    %v344 = vadd.f32 %v340, %v343
    %vm345 = vweird.f32 %v294
    %vm346 = vweird.f32 %v340
    %vm347 = vmor %vm345, %vm346
    %v348 = vsel %vm347, %v340, %v344
    %v349 = vand.u32 2147483647, %v294
    %vm350 = vcmp.eq.f32.partialorder %v349, 8.507059e+37
    %v351 = vand.u32 %v294, 2147483648
    %v352 = vor.u32 1.1754944e-38, %v351
    %v353 = vsel %vm350, %v352, %v348
    %v354 = vmul.f32 1.0, %v353
    %v355 = vmul.f32 %v261, %v309
    %v356 = vmul.f32 %v275, %v324
    %v357 = vmul.f32 %v263, %v339
    %v358 = vmul.f32 %v277, %v354
    %v359 = vld [vmem:[#allocation3] sm:$0xff]
    %v360 = vld [vmem:[#allocation3 + $0x8] sm:$0xff]
    %v361 = vpack.c.bf16 %v357, %v355
    %v362 = vpack.c.bf16 %v358, %v356
    %v363 = vld [vmem:[#allocation10] sm:$0xf]
    %v364 = vld [vmem:[#allocation10 + $0x4] sm:$0xf]
    %v365 = vld [vmem:[#allocation10 + $0x8] sm:$0xf]
    %v366 = vld [vmem:[#allocation10 + $0xc] sm:$0xf]
    %v367 = vld [vmem:[#allocation10 + $0x10] sm:$0xf]
    %v368 = vld [vmem:[#allocation10 + $0x14] sm:$0xf]
    %v369 = vld [vmem:[#allocation10 + $0x18] sm:$0xf]
    %v370 = vld [vmem:[#allocation10 + $0x1c] sm:$0xf]
    %v371 = vld [vmem:[#allocation10 + $0x20] sm:$0xf]
    %v372 = vld [vmem:[#allocation10 + $0x24] sm:$0xf]
    %v373 = vld [vmem:[#allocation10 + $0x28] sm:$0xf]
    %v374 = vld [vmem:[#allocation10 + $0x2c] sm:$0xf]
    %v375 = vld [vmem:[#allocation10 + $0x30] sm:$0xf]
    %v376 = vld [vmem:[#allocation10 + $0x34] sm:$0xf]
    %v377 = vld [vmem:[#allocation10 + $0x38] sm:$0xf]
    %v378 = vld [vmem:[#allocation10 + $0x3c] sm:$0xf]
    %v379 = vld [vmem:[#allocation10 + $0x40] sm:$0xf]
    %v380 = vld [vmem:[#allocation10 + $0x44] sm:$0xf]
    %v381 = vld [vmem:[#allocation10 + $0x48] sm:$0xf]
    %v382 = vld [vmem:[#allocation10 + $0x4c] sm:$0xf]
    %v383 = vld [vmem:[#allocation10 + $0x50] sm:$0xf]
    %v384 = vld [vmem:[#allocation10 + $0x54] sm:$0xf]
    %v385 = vld [vmem:[#allocation10 + $0x58] sm:$0xf]
    %v386 = vld [vmem:[#allocation10 + $0x5c] sm:$0xf]
    %v387 = vld [vmem:[#allocation10 + $0x60] sm:$0xf]
    %v388 = vld [vmem:[#allocation10 + $0x64] sm:$0xf]
    %v389 = vld [vmem:[#allocation10 + $0x68] sm:$0xf]
    %v390 = vld [vmem:[#allocation10 + $0x6c] sm:$0xf]
    %v391 = vld [vmem:[#allocation10 + $0x70] sm:$0xf]
    %v392 = vld [vmem:[#allocation10 + $0x74] sm:$0xf]
    %v393 = vld [vmem:[#allocation10 + $0x78] sm:$0xf]
    %v394 = vld [vmem:[#allocation10 + $0x7c] sm:$0xf]
    %v427 = vunpack.c.l.b16 %v363
    %v428 = vunpack.c.l.b16 %v364
    %v429 = vunpack.c.l.b16 %v365
    %v430 = vunpack.c.l.b16 %v366
    %v431 = vunpack.c.l.b16 %v367
    %v432 = vunpack.c.l.b16 %v368
    %v433 = vunpack.c.l.b16 %v369
    %v434 = vunpack.c.l.b16 %v370
    %v435 = vunpack.c.l.b16 %v371
    %v436 = vunpack.c.l.b16 %v372
    %v437 = vunpack.c.l.b16 %v373
    %v438 = vunpack.c.l.b16 %v374
    %v439 = vunpack.c.l.b16 %v375
    %v440 = vunpack.c.l.b16 %v376
    %v441 = vunpack.c.l.b16 %v377
    %v442 = vunpack.c.l.b16 %v378
    %v443 = vunpack.c.l.b16 %v379
    %v444 = vunpack.c.l.b16 %v380
    %v445 = vunpack.c.l.b16 %v381
    %v446 = vunpack.c.l.b16 %v382
    %v447 = vunpack.c.l.b16 %v383
    %v448 = vunpack.c.l.b16 %v384
    %v449 = vunpack.c.l.b16 %v385
    %v450 = vunpack.c.l.b16 %v386
    %v451 = vunpack.c.l.b16 %v387
    %v452 = vunpack.c.l.b16 %v388
    %v453 = vunpack.c.l.b16 %v389
    %v454 = vunpack.c.l.b16 %v390
    %v455 = vunpack.c.l.b16 %v391
    %v456 = vunpack.c.l.b16 %v392
    %v457 = vunpack.c.l.b16 %v393
    %v458 = vunpack.c.l.b16 %v394
    %v459 = vpack.c.b16 %v428, %v427
    %v460 = vpack.c.b16 %v430, %v429
    %v461 = vpack.c.b16 %v432, %v431
    %v462 = vpack.c.b16 %v434, %v433
    %v463 = vpack.c.b16 %v436, %v435
    %v464 = vpack.c.b16 %v438, %v437
    %v465 = vpack.c.b16 %v440, %v439
    %v466 = vpack.c.b16 %v442, %v441
    %v467 = vpack.c.b16 %v444, %v443
    %v468 = vpack.c.b16 %v446, %v445
    %v469 = vpack.c.b16 %v448, %v447
    %v470 = vpack.c.b16 %v450, %v449
    %v471 = vpack.c.b16 %v452, %v451
    %v472 = vpack.c.b16 %v454, %v453
    %v473 = vpack.c.b16 %v456, %v455
    %v474 = vpack.c.b16 %v458, %v457
    %491 = vmatpush.bf16.msra.mxu0 %v466
    %492 = vmatpush.bf16.msra.mxu0 %v465
    %493 = vmatpush.bf16.msra.mxu0 %v464
    %494 = vmatpush.bf16.msra.mxu0 %v463
    %495 = vmatpush.bf16.msra.mxu0 %v462
    %496 = vmatpush.bf16.msra.mxu0 %v461
    %497 = vmatpush.bf16.msra.mxu0 %v460
    %498 = vmatpush.bf16.msra.mxu0 %v459
    %499 = vmatmul.bf16.gmra.mxu0 %v361
    %v500 = vpop.f32.mrf.mxu0
    %v501 = vadd.f32 0.0, %v500
    %v502 = vpop.f32.mrf.mxu0
    %v503 = vadd.f32 0.0, %v502
    %504 = vdwg.mxu0
    %505 = vmatpush.bf16.msra.mxu0 %v474
    %506 = vmatpush.bf16.msra.mxu0 %v473
    %507 = vmatpush.bf16.msra.mxu0 %v472
    %508 = vmatpush.bf16.msra.mxu0 %v471
    %509 = vmatpush.bf16.msra.mxu0 %v470
    %510 = vmatpush.bf16.msra.mxu0 %v469
    %511 = vmatpush.bf16.msra.mxu0 %v468
    %512 = vmatpush.bf16.msra.mxu0 %v467
    %513 = vmatmul.bf16.gmra.mxu0 %v362
    %v514 = vpop.f32.mrf.mxu0
    %v515 = vadd.f32 %v501, %v514
    %v516 = vpop.f32.mrf.mxu0
    %v517 = vadd.f32 %v503, %v516
    %518 = vdwg.mxu0
    %v519 = vadd.f32 %v359, %v515
    %v520 = vadd.f32 %v360, %v517
    %521 = vst [vmem:[#allocation3] sm:$0xff] %v519
    %522 = vst [vmem:[#allocation3 + $0x8] sm:$0xff] %v520
    // Predicated region
    $region42: #{tpu_custom_call.1} parent=1 // pred_check
      %p523 = pneg %p82
    $region43: #{tpu_custom_call.1} parent=1 // pred_check_branch
      %525 = sbr.rel (%p523) target = $region45
    $region44: #{tpu_custom_call.1} parent=1 // pred_region
      %v526 = vld [vmem:[#allocation4] sm:$0xff]
      %v527 = vld [vmem:[#allocation4 + $0x8] sm:$0xff]
      %v528 = vld [vmem:[#allocation3] sm:$0xff]
      %v529 = vld [vmem:[#allocation3 + $0x8] sm:$0xff]
      %v530 = vld [vmem:[%s4] sm:$0x1]
      %v532 = vperm.slane %v530, 0
      %v534 = vadd.f32 %v528, %v532
      %v535 = vadd.f32 %v529, %v532
      %v536 = vadd.f32 %v526, %v534
      %v537 = vadd.f32 %v527, %v535
      %538 = vst [vmem:[#allocation12] sm:$0xff] %v536
      %539 = vst [vmem:[#allocation12 + $0x8] sm:$0xff] %v537
    $region45: #{tpu_custom_call.1} parent=1 // pred_fallthru
      _
    // Predicated region
    $region46: #{tpu_custom_call.1} parent=1 // pred_check
      _
    $region47: #{tpu_custom_call.1} parent=1 // pred_check_branch
      %541 = sbr.rel (0) target = $region49
    $region48: #{tpu_custom_call.1} parent=1 // pred_region
      %543 = vsyncadd [#allocation6], 0
      %s544 = sshll.u32 [#allocation12], 4
      %s545 = int_to_ptr.vmem [resolvable:$true] %s544
      %s546 = sshll.u32 %s5, 4
      %s547 = int_to_ptr.hbm [resolvable:$true] %s546
      %552 = dma.vmem_to_hbm [thread:$0]  %s545, 256, %s547, [#allocation6], 128, 128, 8
    $region49: #{tpu_custom_call.1} parent=1 // pred_fallthru
      _
    // Predicated region
    $region50: #{tpu_custom_call.1} parent=1 // pred_check
      _
    $region51: #{tpu_custom_call.1} parent=1 // pred_check_branch
      %554 = sbr.rel (0) target = $region53
    $region52: #{tpu_custom_call.1} parent=1 // pred_region
      %556 = dma.done [#allocation6], 256
    $region53: #{tpu_custom_call.1} parent=1 // pred_fallthru
      _
    %557 = vsyncpa [#allocation5], 1
    %558 = vsyncpa [#allocation8], 1
    %559 = vsyncpa [#allocation11], 1
    %560 = vsyncpa [#allocation6], 1

</llo_original>
